<compile_context>
chip_gen: v6e
topology: v6e:2x2x1
jax: 0.10.0
libtpu: 0.0.40
codegen_flags: <defaults>
</compile_context>

<pallas_src>
import jax
import jax.numpy as jnp
from jax.experimental import pallas as pl
from jax.experimental.pallas import tpu as pltpu


def _round_up(a, m):
    return ((a + m - 1) // m) * m


def _pair_fused_kernel(x_ref, w_ref, b_ref, o_ref, acc_ref):
    """One (tm, tn) output tile of y = x @ [w1|w2] + [b1|b2] (K-tiled)."""
    k = pl.program_id(2)

    @pl.when(k == 0)
    def _():
        acc_ref[...] = jnp.zeros_like(acc_ref)

    acc_ref[...] += jnp.dot(
        x_ref[...], w_ref[...], preferred_element_type=jnp.float32
    )

    @pl.when(k == pl.num_programs(2) - 1)
    def _():
        # Single broadcast bias add on the fused tile, then one dense store.
        o_ref[...] = (acc_ref[...] + b_ref[...]).astype(o_ref.dtype)


def pair_layer(x, w1, b1, w2, b2, *, tm=None, tn=None, tk=None,
               compute_dtype=None):
    """Pallas-backed PairLayer forward: returns (x @ w1 + b1, x @ w2 + b2)."""
    B, H = x.shape
    O1 = w1.shape[1]
    O2 = w2.shape[1]
    O = O1 + O2
    out_dtype = x.dtype

    # ---- Fuse the two branches into one weight / bias -----------------------
    w = jnp.concatenate([w1, w2], axis=1)                      # (H, O)
    b = jnp.concatenate(
        [jnp.reshape(b1, (1, O1)), jnp.reshape(b2, (1, O2))], axis=1
    ).astype(jnp.float32)                                      # (1, O), f32

    # Optional low-precision compute path (accumulation stays f32 in-kernel).
    if compute_dtype is not None:
        x_c = x.astype(compute_dtype)
        w_c = w.astype(compute_dtype)
    else:
        x_c = x
        w_c = w

    # ---- Tile selection ------------------------------------------------------
    # Row tile: multiple of 8, capped so real batches give a multi-step
    # pipelined grid that can shard across v7x's two TensorCores.
    if tm is None:
        tm = min(512, _round_up(B, 8))
    tm = max(8, _round_up(min(tm, _round_up(B, 8)), 8))
    Bp = _round_up(B, tm)

    # Output (lane) tile: multiple of 128 so stores are unmasked & lane-dense.
    Op_raw = _round_up(O, 128)
    if tn is None:
        tn = min(512, Op_raw)
    tn = max(128, (min(tn, Op_raw) // 128) * 128)
    Op = _round_up(O, tn)

    # Contraction tile: full H when it fits, else 128-aligned chunks.
    if tk is None:
        tk = H if H <= 1024 else 512
    if tk >= H:
        tk = H
        Hp = H
    else:
        tk = max(128, (tk // 128) * 128)
        Hp = _round_up(H, tk)

    # ---- Zero-pad to tile multiples (ragged batch / odd feature widths) ------
    if Bp != B or Hp != H:
        x_c = jnp.pad(x_c, ((0, Bp - B), (0, Hp - H)))
    if Hp != H or Op != O:
        w_c = jnp.pad(w_c, ((0, Hp - H), (0, Op - O)))
    if Op != O:
        b = jnp.pad(b, ((0, 0), (0, Op - O)))

    # ---- VMEM budget / cost hint ---------------------------------------------
    in_bytes = jnp.dtype(x_c.dtype).itemsize
    out_bytes = jnp.dtype(out_dtype).itemsize
    vmem_needed = (2 * (tm * tk * in_bytes + tk * tn * in_bytes
                        + tn * 4 + tm * tn * out_bytes)
                   + tm * tn * 4)
    vmem_limit = int(min(64 * 1024 * 1024,
                         max(2 * vmem_needed, 32 * 1024 * 1024)))

    cost = pl.CostEstimate(
        flops=2 * Bp * Hp * Op,
        transcendentals=0,
        bytes_accessed=(Bp * Hp * in_bytes + Hp * Op * in_bytes
                        + Op * 4 + Bp * Op * out_bytes),
    )

    out_p = pl.pallas_call(
        _pair_fused_kernel,
        out_shape=jax.ShapeDtypeStruct((Bp, Op), out_dtype),
        grid_spec=pltpu.PrefetchScalarGridSpec(
            num_scalar_prefetch=0,
            grid=(Bp // tm, Op // tn, Hp // tk),
            in_specs=[
                pl.BlockSpec((tm, tk), lambda i, j, k: (i, k)),   # x rows / K
                pl.BlockSpec((tk, tn), lambda i, j, k: (k, j)),   # fused weight
                pl.BlockSpec((1, tn), lambda i, j, k: (0, j)),    # fused bias
            ],
            out_specs=pl.BlockSpec((tm, tn), lambda i, j, k: (i, j)),
            scratch_shapes=[pltpu.VMEM((tm, tn), jnp.float32)],
        ),
        compiler_params=pltpu.CompilerParams(
            dimension_semantics=("parallel", "parallel", "arbitrary"),
            vmem_limit_bytes=vmem_limit,
        ),
        cost_estimate=cost,
    )(x_c, w_c, b)

    # Drop padding and split the fused output back into the pair.
    y = out_p[:B, :O]
    return y[:, :O1], y[:, O1:]


if __name__ == "__main__":
    # Small shapes: batch=8, hidden=32, model1 -> 16 features, model2 -> 24.
    B, H, O1, O2 = 8, 32, 16, 24

    key = jax.random.PRNGKey(0)
    kx, k1, k2, k3, k4 = jax.random.split(key, 5)

    x = jax.random.normal(kx, (B, H), dtype=jnp.float32)

    # Deterministic parameter init (synthetic, not a checkpoint load).
    w1 = jax.random.normal(k1, (H, O1), dtype=jnp.float32) * 0.05
    b1 = jax.random.normal(k2, (1, O1), dtype=jnp.float32) * 0.01
    w2 = jax.random.normal(k3, (H, O2), dtype=jnp.float32) * 0.05
    b2 = jax.random.normal(k4, (1, O2), dtype=jnp.float32) * 0.01

    # Reference: the two independent sub-model forwards.
    r1 = x @ w1 + b1
    r2 = x @ w2 + b2

    # f32 path (exact check).
    y1, y2 = pair_layer(x, w1, b1, w2, b2)
    jax.block_until_ready((y1, y2))
    assert y1.shape == (B, O1) and y2.shape == (B, O2)
    assert jnp.allclose(y1, r1, atol=1e-5, rtol=1e-5)
    assert jnp.allclose(y2, r2, atol=1e-5, rtol=1e-5)

    # bf16 compute path (recommended for v6e/v7x); f32 accumulation, loose tol.
    z1, z2 = pair_layer(x, w1, b1, w2, b2, compute_dtype=jnp.bfloat16)
    jax.block_until_ready((z1, z2))
    assert jnp.allclose(z1, r1, atol=5e-2, rtol=5e-2)
    assert jnp.allclose(z2, r2, atol=5e-2, rtol=5e-2)

    print("KERNEL_OK")
</pallas_src>

<mosaic_0001>
module attributes {stable_mosaic.version = 11 : i64} {
  func.func @_pair_fused_kernel(%arg0: i32, %arg1: i32, %arg2: i32, %arg3: memref<8x32xf32, #tpu.memory_space<vmem>>, %arg4: memref<32x128xf32, #tpu.memory_space<vmem>>, %arg5: memref<1x128xf32, #tpu.memory_space<vmem>>, %arg6: memref<8x128xf32, #tpu.memory_space<vmem>>, %arg7: memref<8x128xf32, #tpu.memory_space<vmem>>) attributes {dimension_semantics = [#tpu.dimension_semantics<parallel>, #tpu.dimension_semantics<parallel>, #tpu.dimension_semantics<arbitrary>], iteration_bounds = array<i64: 1, 1, 1>, scalar_prefetch = 0 : i64, scratch_operands = 1 : i64, tpu.core_type = #tpu.core_type<tc>, window_params = [{transform_indices = @transform_0, window_bounds = array<i64: 8, 32>}, {transform_indices = @transform_1, window_bounds = array<i64: 32, 128>}, {transform_indices = @transform_2, window_bounds = array<i64: 1, 128>}, {transform_indices = @transform_3, window_bounds = array<i64: 8, 128>}]} {
    %c0_i32 = arith.constant 0 : i32
    %0 = arith.cmpi eq, %arg2, %c0_i32 : i32
    %1 = arith.extui %0 : i1 to i32
    %c0_i32_0 = arith.constant 0 : i32
    %2 = arith.cmpi ne, %1, %c0_i32_0 : i32
    scf.if %2 {
      %cst_10 = arith.constant 0.000000e+00 : f32
      %12 = vector.broadcast %cst_10 : f32 to vector<8x128xf32>
      %c0_11 = arith.constant 0 : index
      %c0_12 = arith.constant 0 : index
      %13 = vector.load %arg7[%c0_11, %c0_12] : memref<8x128xf32, #tpu.memory_space<vmem>>, vector<8x128xf32>
      tpu.vector_store %arg7[%c0_11, %c0_12], %12 {strides = array<i32>} : memref<8x128xf32, #tpu.memory_space<vmem>>, vector<8x128xf32>,
    } else {
    }
    %c0 = arith.constant 0 : index
    %c0_1 = arith.constant 0 : index
    %3 = vector.load %arg7[%c0, %c0_1] : memref<8x128xf32, #tpu.memory_space<vmem>>, vector<8x128xf32>
    %c0_2 = arith.constant 0 : index
    %c0_3 = arith.constant 0 : index
    %4 = vector.load %arg3[%c0_2, %c0_3] : memref<8x32xf32, #tpu.memory_space<vmem>>, vector<8x32xf32>
    %c0_4 = arith.constant 0 : index
    %c0_5 = arith.constant 0 : index
    %5 = vector.load %arg4[%c0_4, %c0_5] : memref<32x128xf32, #tpu.memory_space<vmem>>, vector<32x128xf32>
    %cst = arith.constant dense<0.000000e+00> : vector<8x128xf32>
    %6 = tpu.matmul %4, %5, %cst {dimension_numbers = #tpu.dot_dimension_numbers<[1], [0], [0], [1], [0, 0, 1, 1], [], []>} : vector<8x32xf32>, vector<32x128xf32>, vector<8x128xf32> -> vector<8x128xf32>
    %7 = arith.addf %3, %6 : vector<8x128xf32>
    %c0_6 = arith.constant 0 : index
    %c0_7 = arith.constant 0 : index
    %8 = vector.load %arg7[%c0_6, %c0_7] : memref<8x128xf32, #tpu.memory_space<vmem>>, vector<8x128xf32>
    tpu.vector_store %arg7[%c0_6, %c0_7], %7 {strides = array<i32>} : memref<8x128xf32, #tpu.memory_space<vmem>>, vector<8x128xf32>,
    %c0_i32_8 = arith.constant 0 : i32
    %9 = arith.cmpi eq, %arg2, %c0_i32_8 : i32
    %10 = arith.extui %9 : i1 to i32
    %c0_i32_9 = arith.constant 0 : i32
    %11 = arith.cmpi ne, %10, %c0_i32_9 : i32
    scf.if %11 {
      %c0_10 = arith.constant 0 : index
      %c0_11 = arith.constant 0 : index
      %12 = vector.load %arg7[%c0_10, %c0_11] : memref<8x128xf32, #tpu.memory_space<vmem>>, vector<8x128xf32>
      %c0_12 = arith.constant 0 : index
      %c0_13 = arith.constant 0 : index
      %13 = vector.load %arg5[%c0_12, %c0_13] : memref<1x128xf32, #tpu.memory_space<vmem>>, vector<1x128xf32>
      %14 = vector.broadcast %13 : vector<1x128xf32> to vector<8x128xf32>
      %15 = arith.addf %12, %14 : vector<8x128xf32>
      %c0_14 = arith.constant 0 : index
      %c0_15 = arith.constant 0 : index
      %16 = vector.load %arg6[%c0_14, %c0_15] : memref<8x128xf32, #tpu.memory_space<vmem>>, vector<8x128xf32>
      tpu.vector_store %arg6[%c0_14, %c0_15], %15 {strides = array<i32>} : memref<8x128xf32, #tpu.memory_space<vmem>>, vector<8x128xf32>,
    } else {
    }
    return
  }
  func.func @transform_0(%arg0: i32, %arg1: i32, %arg2: i32) -> (i32, i32) {
    %c0_i32 = arith.constant 0 : i32
    return %arg0, %arg2 : i32, i32
  }
  func.func @transform_1(%arg0: i32, %arg1: i32, %arg2: i32) -> (i32, i32) {
    %c0_i32 = arith.constant 0 : i32
    return %arg2, %arg1 : i32, i32
  }
  func.func @transform_2(%arg0: i32, %arg1: i32, %arg2: i32) -> (i32, i32) {
    %c0_i32 = arith.constant 0 : i32
    %c0_i32_0 = arith.constant 0 : i32
    return %c0_i32, %arg1 : i32, i32
  }
  func.func @transform_3(%arg0: i32, %arg1: i32, %arg2: i32) -> (i32, i32) {
    %c0_i32 = arith.constant 0 : i32
    return %arg0, %arg1 : i32, i32
  }
}

</mosaic_0001>

<llo_original>
// kernel: tpu_custom_call.1
$region0: #{tpu_custom_call.1}
  #allocation0 [shape = 'u32[]', space=smem, size = 0x4, offset = 0x4, fixed_abs, tag = 'smem constant byte address 0x4 - core index']
  #allocation1 [shape = 'u32[144,128]{1,0:T(1,128)}', space=vmem, size = 0x12000, scoped, tag = 'internal scratch']
  #allocation2 [shape = 'f32[8,128]{1,0:T(8,128)}', space=vmem, size = 0x1000, scoped, tag = 'scratch operand']
  %s0 = inlined_call_operand.hbm [shape: f32[8,32], index: 0, kind: input, shape index: {}]
  %s1 = inlined_call_operand.hbm [shape: f32[32,128], index: 1, kind: input, shape index: {}]
  %s2 = inlined_call_operand.vmem [shape: f32[1,128], index: 2, kind: input, shape index: {}]
  %s3 = inlined_call_operand.hbm [shape: f32[8,128], index: 3, kind: output, shape index: {}]
  %s4 = sld [smem:[#allocation0]]
  $region38: #{tpu_custom_call.1} parent=0
    _
  %s6 = ssub.s32 1, %s4
  %s7 = scalar_select 0, %s6, %s4
  $region1: #{tpu_custom_call.1} parent=0
    #allocation3 [shape = 'u8[4096]{0}', space=vmem, size = 0x1000, scoped, tag = 'input window, operand 0, single buffered']
    #allocation4 [shape = 's32[1]{0}', space=sflag, size = 0x4, scoped, tag = 'scoped memory for tpu_custom_call.1']
    #allocation5 [shape = 's32[1]{0}', space=sflag, size = 0x4, scoped, tag = 'scoped memory for tpu_custom_call.1']
    #allocation6 [shape = 'u8[16384]{0}', space=vmem, size = 0x4000, scoped, tag = 'input window, operand 1, single buffered']
    #allocation7 [shape = 's32[1]{0}', space=sflag, size = 0x4, scoped, tag = 'scoped memory for tpu_custom_call.1']
    #allocation8 [shape = 'u8[4096]{0}', space=vmem, size = 0x1000, scoped, tag = 'output window, operand 0, single buffered']
    %8 = vsyncpa [#allocation4], 0
    %9 = vsyncpa [#allocation7], 0
    %10 = vsyncpa [#allocation5], 0
    // Predicated region
    $region2: #{tpu_custom_call.1} parent=1 // pred_check
      _
    $region3: #{tpu_custom_call.1} parent=1 // pred_check_branch
      %12 = sbr.rel (0) target = $region5
    $region4: #{tpu_custom_call.1} parent=1 // pred_region
      %s14 = ssub.s32 128, 128
      %15 = vsyncadd [#allocation4], %s14
      %s17 = sshll.u32 [#allocation3], 4
      %s18 = int_to_ptr.vmem [resolvable:$true] %s17
      %20 = dma.hbm_to_vmem [thread:$0]  %s0, 128, %s18, [#allocation4]
    $region5: #{tpu_custom_call.1} parent=1 // pred_fallthru
      _
    // Predicated region
    $region6: #{tpu_custom_call.1} parent=1 // pred_check
      _
    $region7: #{tpu_custom_call.1} parent=1 // pred_check_branch
      %22 = sbr.rel (0) target = $region9
    $region8: #{tpu_custom_call.1} parent=1 // pred_region
      %s24 = ssub.s32 512, 512
      %25 = vsyncadd [#allocation7], %s24
      %s26 = sshll.u32 [#allocation6], 4
      %s27 = int_to_ptr.vmem [resolvable:$true] %s26
      %32 = dma.hbm_to_vmem [thread:$0]  %s1, 512, %s27, [#allocation7], 128, 128, 8
    $region9: #{tpu_custom_call.1} parent=1 // pred_fallthru
      _
    // Predicated region
    $region10: #{tpu_custom_call.1} parent=1 // pred_check
      _
    $region11: #{tpu_custom_call.1} parent=1 // pred_check_branch
      %34 = sbr.rel (0) target = $region13
    $region12: #{tpu_custom_call.1} parent=1 // pred_region
      _
    $region13: #{tpu_custom_call.1} parent=1 // pred_fallthru
      _
    // Predicated region
    $region14: #{tpu_custom_call.1} parent=1 // pred_check
      _
    $region15: #{tpu_custom_call.1} parent=1 // pred_check_branch
      %36 = sbr.rel (0) target = $region17
    $region16: #{tpu_custom_call.1} parent=1 // pred_region
      %37 = dma.done [#allocation4], 128
    $region17: #{tpu_custom_call.1} parent=1 // pred_fallthru
      _
    // Predicated region
    $region18: #{tpu_custom_call.1} parent=1 // pred_check
      _
    $region19: #{tpu_custom_call.1} parent=1 // pred_check_branch
      %39 = sbr.rel (0) target = $region21
    $region20: #{tpu_custom_call.1} parent=1 // pred_region
      %40 = dma.done [#allocation7], 512
    $region21: #{tpu_custom_call.1} parent=1 // pred_fallthru
      _
    %p41 = scmp.eq.s32.totalorder 0, 0
    // Predicated region
    $region22: #{tpu_custom_call.1} parent=1 // pred_check
      %p42 = pneg %p41
    $region23: #{tpu_custom_call.1} parent=1 // pred_check_branch
      %44 = sbr.rel (%p42) target = $region25
    $region24: #{tpu_custom_call.1} parent=1 // pred_region
      %45 = vst [vmem:[#allocation2] sm:$0xff] 0.0
    $region25: #{tpu_custom_call.1} parent=1 // pred_fallthru
      _
    %v46 = vld [vmem:[#allocation2] sm:$0xff]
    %v47 = vld [vmem:[#allocation3] sm:$0xff]
    %v48 = vld [vmem:[#allocation6] sm:$0xff]
    %v49 = vld [vmem:[#allocation6 + $0x8] sm:$0xff]
    %v50 = vld [vmem:[#allocation6 + $0x10] sm:$0xff]
    %v51 = vld [vmem:[#allocation6 + $0x18] sm:$0xff]
    %vm52 = vcmask 261120
    %v54 = vsel %vm52, %v47, 0
    %56 = vmatprep.subr.mxu0 0.0
    %57 = vmatpush1.msra.mxu0 0.0
    %58 = vmatprep.subr.mxu0 0.0
    %59 = vmatpush1.msra.mxu0 0.0
    %60 = vmatprep.subr.mxu0 0.0
    %61 = vmatpush1.msra.mxu0 0.0
    %62 = vmatprep.subr.mxu0 0.0
    %63 = vmatpush1.msra.mxu0 0.0
    %64 = vmatprep.subr.mxu0 0.0
    %65 = vmatpush1.msra.mxu0 0.0
    %66 = vmatprep.subr.mxu0 0.0
    %67 = vmatpush1.msra.mxu0 0.0
    %68 = vmatprep.subr.mxu0 0.0
    %69 = vmatpush1.msra.mxu0 0.0
    %70 = vmatprep.subr.mxu0 0.0
    %71 = vmatpush1.msra.mxu0 0.0
    %72 = vmatprep.subr.mxu0 0.0
    %73 = vmatpush1.msra.mxu0 0.0
    %74 = vmatprep.subr.mxu0 0.0
    %75 = vmatpush1.msra.mxu0 0.0
    %76 = vmatprep.subr.mxu0 0.0
    %77 = vmatpush1.msra.mxu0 0.0
    %78 = vmatprep.subr.mxu0 0.0
    %79 = vmatpush1.msra.mxu0 0.0
    %80 = vmatprep.subr.mxu0 0.0
    %81 = vmatpush1.msra.mxu0 %v51
    %82 = vmatprep.subr.mxu0 0.0
    %83 = vmatpush1.msra.mxu0 %v50
    %84 = vmatprep.subr.mxu0 0.0
    %85 = vmatpush1.msra.mxu0 %v49
    %86 = vmatprep.subr.mxu0 0.0
    %87 = vmatpush1.msra.mxu0 %v48
    %88 = vmatprep.subr.mxu0 0.0
    %89 = vmatpush2.msra.mxu0 0.0
    %90 = vmatprep.subr.mxu0 0.0
    %91 = vmatpush2.msra.mxu0 0.0
    %92 = vmatprep.subr.mxu0 0.0
    %93 = vmatpush2.msra.mxu0 0.0
    %94 = vmatprep.subr.mxu0 0.0
    %95 = vmatpush2.msra.mxu0 0.0
    %96 = vmatprep.subr.mxu0 0.0
    %97 = vmatpush2.msra.mxu0 0.0
    %98 = vmatprep.subr.mxu0 0.0
    %99 = vmatpush2.msra.mxu0 0.0
    %100 = vmatprep.subr.mxu0 0.0
    %101 = vmatpush2.msra.mxu0 0.0
    %102 = vmatprep.subr.mxu0 0.0
    %103 = vmatpush2.msra.mxu0 0.0
    %104 = vmatprep.subr.mxu0 0.0
    %105 = vmatpush2.msra.mxu0 0.0
    %106 = vmatprep.subr.mxu0 0.0
    %107 = vmatpush2.msra.mxu0 0.0
    %108 = vmatprep.subr.mxu0 0.0
    %109 = vmatpush2.msra.mxu0 0.0
    %110 = vmatprep.subr.mxu0 0.0
    %111 = vmatpush2.msra.mxu0 0.0
    %112 = vmatprep.subr.mxu0 0.0
    %113 = vmatpush2.msra.mxu0 0.0
    %114 = vmatprep.subr.mxu0 0.0
    %115 = vmatpush2.msra.mxu0 0.0
    %116 = vmatprep.subr.mxu0 0.0
    %117 = vmatpush2.msra.mxu0 0.0
    %118 = vmatprep.subr.mxu0 0.0
    %119 = vmatpush2.msra.mxu0 0.0
    %120 = vmatprep.mubr.f32.mxu0 0.0
    %121 = vmatmul.mubr.f32.gmra.mxu0 %v54
    %v122 = vpop.f32.mrf.mxu0
    %v123 = vadd.f32 0.0, %v122
    %v124 = vpop.f32.mrf.mxu0
    %125 = vdwg.mxu0
    %v126 = vadd.f32 %v46, %v123
    %127 = vst [vmem:[#allocation2] sm:$0xff] %v126
    // Predicated region
    $region26: #{tpu_custom_call.1} parent=1 // pred_check
      %p128 = pneg %p41
    $region27: #{tpu_custom_call.1} parent=1 // pred_check_branch
      %130 = sbr.rel (%p128) target = $region29
    $region28: #{tpu_custom_call.1} parent=1 // pred_region
      %v131 = vld [vmem:[#allocation2] sm:$0xff]
      %v132 = vld [vmem:[%s2] sm:$0x1]
      %v134 = vlaneseq
      %v135 = vshrl.u32 %v134, 7
      %v136 = vsub.s32 0, %v135
      %v137 = vrot.slane %v132, %v136
      %v139 = vadd.f32 %v131, %v137
      %140 = vst [vmem:[#allocation8] sm:$0xff] %v139
    $region29: #{tpu_custom_call.1} parent=1 // pred_fallthru
      _
    // Predicated region
    $region30: #{tpu_custom_call.1} parent=1 // pred_check
      _
    $region31: #{tpu_custom_call.1} parent=1 // pred_check_branch
      %142 = sbr.rel (0) target = $region33
    $region32: #{tpu_custom_call.1} parent=1 // pred_region
      %s144 = ssub.s32 128, 128
      %145 = vsyncadd [#allocation5], %s144
      %s147 = sshll.u32 [#allocation8], 4
      %s148 = int_to_ptr.vmem [resolvable:$true] %s147
      %150 = dma.vmem_to_hbm [thread:$0]  %s148, 128, %s3, [#allocation5]
    $region33: #{tpu_custom_call.1} parent=1 // pred_fallthru
      _
    // Predicated region
    $region34: #{tpu_custom_call.1} parent=1 // pred_check
      _
    $region35: #{tpu_custom_call.1} parent=1 // pred_check_branch
      %152 = sbr.rel (0) target = $region37
    $region36: #{tpu_custom_call.1} parent=1 // pred_region
      %153 = dma.done [#allocation5], 128
    $region37: #{tpu_custom_call.1} parent=1 // pred_fallthru
      _
    %154 = vsyncpa [#allocation4], 1
    %155 = vsyncpa [#allocation7], 1
    %156 = vsyncpa [#allocation5], 1

</llo_original>
